<compile_context>
chip_gen: v5e
topology: v5e:2x2
jax: 0.10.0
libtpu: 0.0.40
codegen_flags: <defaults>
</compile_context>

<pallas_src>
import functools

import jax
import jax.numpy as jnp
from jax.experimental import pallas as pl
from jax.experimental.pallas import tpu as pltpu

_SUBLANE = 8
_LANE = 128
_MAX_TILE_B = 2048
# Conservative budgets so one kernel fits v7x (64 MiB / TensorCore) as well as
# v5e/v6e once vmem_limit_bytes is raised above the scoped defaults.
_ACT_VMEM_BUDGET = 16 << 20   # double-buffered x + out tiles
_W_TILE_BUDGET = 12 << 20     # one weight tile (x2 budgeted for double-buffer)
_VMEM_LIMIT_CAP = 60 << 20


def _round_up(v, m):
    return ((v + m - 1) // m) * m


def _one_layer_kernel(*refs, residual, use_bias, matmul_dtype, precision):
    if use_bias:
        x_ref, w_ref, b_ref, o_ref = refs
    else:
        x_ref, w_ref, o_ref = refs
        b_ref = None

    x = x_ref[...]
    w = w_ref[...]
    if matmul_dtype is not None:
        lhs = x.astype(matmul_dtype)
        rhs = w.astype(matmul_dtype)
    else:
        lhs, rhs = x, w

    # Single Linear layer on the MXU, f32 accumulation.
    res = jnp.dot(lhs, rhs, preferred_element_type=jnp.float32,
                  precision=precision)
    if use_bias:
        res = res + b_ref[...].astype(jnp.float32)
    if residual:
        res = res + x.astype(jnp.float32)
    o_ref[...] = res.astype(o_ref.dtype)


def one_layer_nn(x, w, b=None, *, residual=False, matmul_dtype=None,
                 precision=None):
    """One_Layer_NN forward.

    x: [B, D_in]
    w: [D_in, D_out]   (torch layer1.weight.T; pass H.T if an H was supplied)
    b: optional [D_out] (module default is bias=False -> pass None)
    matmul_dtype: e.g. jnp.bfloat16 to run the MXU in bf16 (f32 accumulate).
    precision: forwarded to jnp.dot (e.g. jax.lax.Precision.HIGHEST for
               tighter f32 parity with the torch Linear).
    """
    B, D_in = x.shape
    d_in_w, D_out = w.shape
    if d_in_w != D_in:
        raise ValueError("weight/input dim mismatch")
    if residual and D_out != D_in:
        raise ValueError("residual=True requires output_dim == input_dim")
    use_bias = b is not None
    out_dtype = x.dtype

    x_isz = x.dtype.itemsize
    w_isz = w.dtype.itemsize
    o_isz = jnp.dtype(out_dtype).itemsize

    # ---- N (output-feature) tiling: only when the whole weight would blow the
    # VMEM budget (v7x has 64 MiB/TC and each TC holds its own resident copy).
    w_bytes = D_in * D_out * w_isz
    if (not residual) and w_bytes > _W_TILE_BUDGET and D_out > _LANE:
        max_tn = max(_LANE, (_W_TILE_BUDGET // (D_in * w_isz)) // _LANE * _LANE)
        tile_n = min(_round_up(D_out, _LANE), max_tn)
        D_out_p = _round_up(_round_up(D_out, _LANE), tile_n)
        pad_n = D_out_p - D_out
    else:
        # TODO(synk): add N/K tiling for the residual path if D_in ever grows
        # past the VMEM budget (residual layers here are small/square).
        tile_n = D_out
        D_out_p = D_out
        pad_n = 0
    nn = D_out_p // tile_n

    # ---- adaptive batch tile: biggest tile that fits the activation budget.
    row_bytes = 2 * (D_in * x_isz + tile_n * o_isz)   # double-buffered in + out
    tile_b = _SUBLANE
    cand = _SUBLANE
    while cand <= _MAX_TILE_B and cand * row_bytes <= _ACT_VMEM_BUDGET:
        tile_b = cand
        cand *= 2
    tile_b = min(tile_b, _round_up(B, _SUBLANE))
    if tile_b >= B:
        tile_b = B                    # full-dim block is always a legal shape
    else:
        tile_b = max(_SUBLANE, (tile_b // _SUBLANE) * _SUBLANE)
    # v7x megacore: make sure the batch axis has >= 2 steps when B permits.
    if B >= 2 * _SUBLANE and pl.cdiv(B, tile_b) < 2:
        tile_b = _round_up(pl.cdiv(B, 2), _SUBLANE)
    nb = pl.cdiv(B, tile_b)           # ragged last tile is masked by Pallas

    # ---- operands (weight/bias only padded on the N-tiled big-weight path).
    if pad_n:
        w_in = jnp.pad(w, ((0, 0), (0, pad_n)))
        b_in = (jnp.pad(jnp.reshape(b, (1, -1)), ((0, 0), (0, pad_n)))
                if use_bias else None)
    else:
        w_in = w
        b_in = jnp.reshape(b, (1, -1)) if use_bias else None
    operands = [x, w_in] + ([b_in] if use_bias else [])

    # ---- VMEM accounting (weight counted double-buffered to stay safe even if
    # the single-buffer request below is not honoured).
    vmem_bytes = (2 * tile_b * D_in * x_isz
                  + 2 * tile_b * tile_n * o_isz
                  + 2 * D_in * tile_n * w_isz
                  + (2 * tile_n * b.dtype.itemsize if use_bias else 0))
    vmem_limit = int(min(max(int(vmem_bytes * 1.25) + (1 << 20), 32 << 20),
                         _VMEM_LIMIT_CAP))

    kernel = functools.partial(_one_layer_kernel, residual=residual,
                               use_bias=use_bias, matmul_dtype=matmul_dtype,
                               precision=precision)

    def _run(single_buffer_resident):
        resident = (nn == 1) and single_buffer_resident
        kw = dict(pipeline_mode=pl.Buffered(1)) if resident else {}
        in_specs = [
            # x: one batch tile per inner grid step (auto double-buffered)
            pl.BlockSpec((tile_b, D_in), lambda n, bb: (bb, 0)),
            # weight: constant (or outer-axis-only) index -> VMEM resident
            pl.BlockSpec((D_in, tile_n), lambda n, bb: (0, n), **kw),
        ]
        if use_bias:
            in_specs.append(pl.BlockSpec((1, tile_n), lambda n, bb: (0, n), **kw))
        out_spec = pl.BlockSpec((tile_b, tile_n), lambda n, bb: (bb, n))
        return pl.pallas_call(
            kernel,
            out_shape=jax.ShapeDtypeStruct((B, D_out_p), out_dtype),
            grid=(nn, nb),
            in_specs=in_specs,
            out_specs=out_spec,
            compiler_params=pltpu.CompilerParams(
                dimension_semantics=("parallel", "parallel"),
                vmem_limit_bytes=vmem_limit,
            ),
        )(*operands)

    try:
        out = _run(True)
    except Exception:
        # pl.Buffered(1) (single-buffered resident weight) not supported on
        # this jax build -> fall back to default double buffering.
        out = _run(False)

    return out if pad_n == 0 else out[:, :D_out]


def init_params(key, input_dim, output_dim, bias=False, dtype=jnp.float32):
    """Mirror nn.Linear's uniform(-1/sqrt(fan_in), +1/sqrt(fan_in)) init.
    Weight stored as [in, out] (== torch weight.T)."""
    bound = 1.0 / (input_dim ** 0.5)
    key, kw, kb = jax.random.split(key, 3)
    w = jax.random.uniform(kw, (input_dim, output_dim), dtype,
                           minval=-bound, maxval=bound)
    b_arr = None
    if bias:
        b_arr = jax.random.uniform(kb, (output_dim,), dtype,
                                   minval=-bound, maxval=bound)
    return w, b_arr


def reference(x, w, b=None, *, residual=False):
    res = jnp.dot(x, w, preferred_element_type=jnp.float32)
    if b is not None:
        res = res + b
    out = res + x if residual else res
    return out.astype(x.dtype)


if __name__ == "__main__":
    key = jax.random.PRNGKey(0)

    # Config 1: module defaults + residual (bias=False, residual=True)
    B, D = 8, 32
    key, kx, kp = jax.random.split(key, 3)
    x = jax.random.normal(kx, (B, D), jnp.float32)
    w, b = init_params(kp, D, D, bias=False)
    out = jax.block_until_ready(one_layer_nn(x, w, b, residual=True))
    ref = reference(x, w, b, residual=True)
    assert out.shape == (B, D)
    assert jnp.allclose(out, ref, atol=1e-2, rtol=1e-2), "mismatch (residual, no-bias)"

    # Config 2: bias=True, residual=False, non-square, D_out not a lane multiple
    B2, Di2, Do2 = 8, 32, 48
    key, kx2, kp2 = jax.random.split(key, 3)
    x2 = jax.random.normal(kx2, (B2, Di2), jnp.float32)
    w2, b2 = init_params(kp2, Di2, Do2, bias=True)
    out2 = jax.block_until_ready(one_layer_nn(x2, w2, b2, residual=False))
    ref2 = reference(x2, w2, b2, residual=False)
    assert out2.shape == (B2, Do2)
    assert jnp.allclose(out2, ref2, atol=1e-2, rtol=1e-2), "mismatch (bias, no-residual)"

    # Config 3: ragged batch (B not a multiple of the tile) + forced 2-step grid
    B3, D3 = 20, 32
    key, kx3, kp3 = jax.random.split(key, 3)
    x3 = jax.random.normal(kx3, (B3, D3), jnp.float32)
    w3, b3 = init_params(kp3, D3, D3, bias=False)
    out3 = jax.block_until_ready(one_layer_nn(x3, w3, b3, residual=True))
    ref3 = reference(x3, w3, b3, residual=True)
    assert out3.shape == (B3, D3)
    assert jnp.allclose(out3, ref3, atol=1e-2, rtol=1e-2), "mismatch (ragged batch)"

    # Config 4: bf16 MXU path (f32 accumulation), bias=True
    B4, Di4, Do4 = 8, 256, 256
    key, kx4, kp4 = jax.random.split(key, 3)
    x4 = jax.random.normal(kx4, (B4, Di4), jnp.float32)
    w4, b4 = init_params(kp4, Di4, Do4, bias=True)
    out4 = jax.block_until_ready(
        one_layer_nn(x4, w4, b4, residual=False, matmul_dtype=jnp.bfloat16))
    ref4 = reference(x4, w4, b4, residual=False)
    assert out4.shape == (B4, Do4)
    assert jnp.allclose(out4, ref4, atol=5e-2, rtol=5e-2), "mismatch (bf16 matmul)"

    print("KERNEL_OK")
</pallas_src>

<mosaic_0001>
module attributes {stable_mosaic.version = 11 : i64} {
  func.func @_one_layer_kernel(%arg0: i32, %arg1: i32, %arg2: memref<8x32xf32, #tpu.memory_space<vmem>>, %arg3: memref<32x32xf32, #tpu.memory_space<vmem>>, %arg4: memref<8x32xf32, #tpu.memory_space<vmem>>) attributes {dimension_semantics = [#tpu.dimension_semantics<parallel>, #tpu.dimension_semantics<parallel>], iteration_bounds = array<i64: 1, 1>, scalar_prefetch = 0 : i64, scratch_operands = 0 : i64, tpu.core_type = #tpu.core_type<tc>, window_params = [{transform_indices = @transform_0, window_bounds = array<i64: 8, 32>}, {pipeline_mode = #tpu.pipeline_mode<synchronous>, transform_indices = @transform_1, window_bounds = array<i64: 32, 32>}, {transform_indices = @transform_2, window_bounds = array<i64: 8, 32>}]} {
    %c0 = arith.constant 0 : index
    %c0_0 = arith.constant 0 : index
    %0 = vector.load %arg2[%c0, %c0_0] : memref<8x32xf32, #tpu.memory_space<vmem>>, vector<8x32xf32>
    %c0_1 = arith.constant 0 : index
    %c0_2 = arith.constant 0 : index
    %1 = vector.load %arg3[%c0_1, %c0_2] : memref<32x32xf32, #tpu.memory_space<vmem>>, vector<32x32xf32>
    %cst = arith.constant dense<0.000000e+00> : vector<8x32xf32>
    %2 = tpu.matmul %0, %1, %cst {dimension_numbers = #tpu.dot_dimension_numbers<[1], [0], [0], [1], [0, 0, 1, 1], [], []>} : vector<8x32xf32>, vector<32x32xf32>, vector<8x32xf32> -> vector<8x32xf32>
    %3 = arith.addf %2, %0 : vector<8x32xf32>
    %c0_3 = arith.constant 0 : index
    %c0_4 = arith.constant 0 : index
    %4 = vector.load %arg4[%c0_3, %c0_4] : memref<8x32xf32, #tpu.memory_space<vmem>>, vector<8x32xf32>
    tpu.vector_store %arg4[%c0_3, %c0_4], %3 {strides = array<i32>} : memref<8x32xf32, #tpu.memory_space<vmem>>, vector<8x32xf32>,
    return
  }
  func.func @transform_0(%arg0: i32, %arg1: i32) -> (i32, i32) {
    %c0_i32 = arith.constant 0 : i32
    %c0_i32_0 = arith.constant 0 : i32
    return %arg1, %c0_i32 : i32, i32
  }
  func.func @transform_1(%arg0: i32, %arg1: i32) -> (i32, i32) {
    %c0_i32 = arith.constant 0 : i32
    %c0_i32_0 = arith.constant 0 : i32
    return %c0_i32, %arg0 : i32, i32
  }
  func.func @transform_2(%arg0: i32, %arg1: i32) -> (i32, i32) {
    %c0_i32 = arith.constant 0 : i32
    return %arg1, %arg0 : i32, i32
  }
}

module attributes {stable_mosaic.version = 11 : i64} {
  func.func @_one_layer_kernel(%arg0: i32, %arg1: i32, %arg2: memref<8x32xf32, #tpu.memory_space<vmem>>, %arg3: memref<32x32xf32, #tpu.memory_space<vmem>>, %arg4: memref<8x32xf32, #tpu.memory_space<vmem>>) attributes {dimension_semantics = [#tpu.dimension_semantics<parallel>, #tpu.dimension_semantics<parallel>], iteration_bounds = array<i64: 1, 1>, scalar_prefetch = 0 : i64, scratch_operands = 0 : i64, tpu.core_type = #tpu.core_type<tc>, window_params = [{transform_indices = @transform_0, window_bounds = array<i64: 8, 32>}, {transform_indices = @transform_1, window_bounds = array<i64: 32, 32>}, {transform_indices = @transform_2, window_bounds = array<i64: 8, 32>}]} {
    %c0 = arith.constant 0 : index
    %c0_0 = arith.constant 0 : index
    %0 = vector.load %arg2[%c0, %c0_0] : memref<8x32xf32, #tpu.memory_space<vmem>>, vector<8x32xf32>
    %c0_1 = arith.constant 0 : index
    %c0_2 = arith.constant 0 : index
    %1 = vector.load %arg3[%c0_1, %c0_2] : memref<32x32xf32, #tpu.memory_space<vmem>>, vector<32x32xf32>
    %cst = arith.constant dense<0.000000e+00> : vector<8x32xf32>
    %2 = tpu.matmul %0, %1, %cst {dimension_numbers = #tpu.dot_dimension_numbers<[1], [0], [0], [1], [0, 0, 1, 1], [], []>} : vector<8x32xf32>, vector<32x32xf32>, vector<8x32xf32> -> vector<8x32xf32>
    %3 = arith.addf %2, %0 : vector<8x32xf32>
    %c0_3 = arith.constant 0 : index
    %c0_4 = arith.constant 0 : index
    %4 = vector.load %arg4[%c0_3, %c0_4] : memref<8x32xf32, #tpu.memory_space<vmem>>, vector<8x32xf32>
    tpu.vector_store %arg4[%c0_3, %c0_4], %3 {strides = array<i32>} : memref<8x32xf32, #tpu.memory_space<vmem>>, vector<8x32xf32>,
    return
  }
  func.func @transform_0(%arg0: i32, %arg1: i32) -> (i32, i32) {
    %c0_i32 = arith.constant 0 : i32
    %c0_i32_0 = arith.constant 0 : i32
    return %arg1, %c0_i32 : i32, i32
  }
  func.func @transform_1(%arg0: i32, %arg1: i32) -> (i32, i32) {
    %c0_i32 = arith.constant 0 : i32
    %c0_i32_0 = arith.constant 0 : i32
    return %c0_i32, %arg0 : i32, i32
  }
  func.func @transform_2(%arg0: i32, %arg1: i32) -> (i32, i32) {
    %c0_i32 = arith.constant 0 : i32
    return %arg1, %arg0 : i32, i32
  }
}

</mosaic_0001>

<llo_original>
// kernel: tpu_custom_call.1
$region0: #{tpu_custom_call.1}
  #allocation0 [shape = 'u32[]', space=smem, size = 0x4, offset = 0x4, fixed_abs, tag = 'smem constant byte address 0x4 - core index']
  #allocation1 [shape = 'u32[72,128]{1,0:T(1,128)}', space=vmem, size = 0x9000, scoped, tag = 'internal scratch']
  %s0 = inlined_call_operand.hbm [shape: f32[8,32], index: 0, kind: input, shape index: {}]
  %s1 = inlined_call_operand.hbm [shape: f32[32,32], index: 1, kind: input, shape index: {}]
  %s2 = inlined_call_operand.hbm [shape: f32[8,32], index: 2, kind: output, shape index: {}]
  %s3 = sld [smem:[#allocation0]]
  $region26: #{tpu_custom_call.1} parent=0
    _
  %s5 = ssub.s32 1, %s3
  %s6 = scalar_select 0, %s5, %s3
  $region1: #{tpu_custom_call.1} parent=0
    #allocation2 [shape = 'u8[4096]{0}', space=vmem, size = 0x1000, scoped, tag = 'input window, operand 0, single buffered']
    #allocation3 [shape = 's32[1]{0}', space=sflag, size = 0x4, scoped, tag = 'scoped memory for tpu_custom_call.1']
    #allocation4 [shape = 's32[1]{0}', space=sflag, size = 0x4, scoped, tag = 'scoped memory for tpu_custom_call.1']
    #allocation5 [shape = 'u8[16384]{0}', space=vmem, size = 0x4000, scoped, tag = 'input window, operand 1, single buffered']
    #allocation6 [shape = 's32[1]{0}', space=sflag, size = 0x4, scoped, tag = 'scoped memory for tpu_custom_call.1']
    #allocation7 [shape = 'u8[4096]{0}', space=vmem, size = 0x1000, scoped, tag = 'output window, operand 0, single buffered']
    %7 = vsyncpa [#allocation3], 0
    %8 = vsyncpa [#allocation6], 0
    %9 = vsyncpa [#allocation4], 0
    // Predicated region
    $region2: #{tpu_custom_call.1} parent=1 // pred_check
      _
    $region3: #{tpu_custom_call.1} parent=1 // pred_check_branch
      %11 = sbr.rel (0) target = $region5
    $region4: #{tpu_custom_call.1} parent=1 // pred_region
      %13 = vsyncadd [#allocation3], 0
      %s15 = sshll.u32 %s0, 4
      %s16 = int_to_ptr.hbm [resolvable:$true] %s15
      %s17 = sshll.u32 [#allocation2], 4
      %s18 = int_to_ptr.vmem [resolvable:$true] %s17
      %20 = dma.hbm_to_vmem [thread:$0]  %s16, 128, %s18, [#allocation3]
    $region5: #{tpu_custom_call.1} parent=1 // pred_fallthru
      _
    // Predicated region
    $region6: #{tpu_custom_call.1} parent=1 // pred_check
      _
    $region7: #{tpu_custom_call.1} parent=1 // pred_check_branch
      %22 = sbr.rel (0) target = $region9
    $region8: #{tpu_custom_call.1} parent=1 // pred_region
      %24 = vsyncadd [#allocation6], 0
      %s25 = sshll.u32 %s1, 4
      %s26 = int_to_ptr.hbm [resolvable:$true] %s25
      %s27 = sshll.u32 [#allocation5], 4
      %s28 = int_to_ptr.vmem [resolvable:$true] %s27
      %33 = dma.hbm_to_vmem [thread:$0]  %s26, 512, %s28, [#allocation6], 128, 128, 8
    $region9: #{tpu_custom_call.1} parent=1 // pred_fallthru
      _
    // Predicated region
    $region10: #{tpu_custom_call.1} parent=1 // pred_check
      _
    $region11: #{tpu_custom_call.1} parent=1 // pred_check_branch
      %35 = sbr.rel (0) target = $region13
    $region12: #{tpu_custom_call.1} parent=1 // pred_region
      %37 = dma.done [#allocation3], 128
    $region13: #{tpu_custom_call.1} parent=1 // pred_fallthru
      _
    // Predicated region
    $region14: #{tpu_custom_call.1} parent=1 // pred_check
      _
    $region15: #{tpu_custom_call.1} parent=1 // pred_check_branch
      %39 = sbr.rel (0) target = $region17
    $region16: #{tpu_custom_call.1} parent=1 // pred_region
      %41 = dma.done [#allocation6], 512
    $region17: #{tpu_custom_call.1} parent=1 // pred_fallthru
      _
    %v42 = vld [vmem:[#allocation2] sm:$0xff]
    %v43 = vld [vmem:[#allocation5] sm:$0xff]
    %v44 = vld [vmem:[#allocation5 + $0x8] sm:$0xff]
    %v45 = vld [vmem:[#allocation5 + $0x10] sm:$0xff]
    %v46 = vld [vmem:[#allocation5 + $0x18] sm:$0xff]
    %vm47 = vcmask 261120
    %v49 = vsel %vm47, %v42, 0
    %51 = vmatpush.msra.mxu0 0.0
    %52 = vmatpush.msra.mxu0 0.0
    %53 = vmatpush.msra.mxu0 0.0
    %54 = vmatpush.msra.mxu0 0.0
    %55 = vmatpush.msra.mxu0 0.0
    %56 = vmatpush.msra.mxu0 0.0
    %57 = vmatpush.msra.mxu0 0.0
    %58 = vmatpush.msra.mxu0 0.0
    %59 = vmatpush.msra.mxu0 0.0
    %60 = vmatpush.msra.mxu0 0.0
    %61 = vmatpush.msra.mxu0 0.0
    %62 = vmatpush.msra.mxu0 0.0
    %63 = vmatpush.msra.mxu0 %v46
    %64 = vmatpush.msra.mxu0 %v45
    %65 = vmatpush.msra.mxu0 %v44
    %66 = vmatpush.msra.mxu0 %v43
    %67 = vmatmul.f32.gmra.mxu0 %v49
    %v68 = vpop.f32.mrf.mxu0
    %v69 = vadd.f32 %v42, %v68
    %70 = vdwg.mxu0
    %71 = vst.msk [vmem:[#allocation7] sm:$0xff] %vm47, %v69
    // Predicated region
    $region18: #{tpu_custom_call.1} parent=1 // pred_check
      _
    $region19: #{tpu_custom_call.1} parent=1 // pred_check_branch
      %73 = sbr.rel (0) target = $region21
    $region20: #{tpu_custom_call.1} parent=1 // pred_region
      %75 = vsyncadd [#allocation4], 0
      %s77 = sshll.u32 [#allocation7], 4
      %s78 = int_to_ptr.vmem [resolvable:$true] %s77
      %s79 = sshll.u32 %s2, 4
      %s80 = int_to_ptr.hbm [resolvable:$true] %s79
      %82 = dma.vmem_to_hbm [thread:$0]  %s78, 128, %s80, [#allocation4]
    $region21: #{tpu_custom_call.1} parent=1 // pred_fallthru
      _
    // Predicated region
    $region22: #{tpu_custom_call.1} parent=1 // pred_check
      _
    $region23: #{tpu_custom_call.1} parent=1 // pred_check_branch
      %84 = sbr.rel (0) target = $region25
    $region24: #{tpu_custom_call.1} parent=1 // pred_region
      %86 = dma.done [#allocation4], 128
    $region25: #{tpu_custom_call.1} parent=1 // pred_fallthru
      _
    %87 = vsyncpa [#allocation3], 1
    %88 = vsyncpa [#allocation6], 1
    %89 = vsyncpa [#allocation4], 1

// kernel: tpu_custom_call.1
$region0: #{tpu_custom_call.1}
  #allocation0 [shape = 'u32[]', space=smem, size = 0x4, offset = 0x4, fixed_abs, tag = 'smem constant byte address 0x4 - core index']
  #allocation1 [shape = 'u32[72,128]{1,0:T(1,128)}', space=vmem, size = 0x9000, scoped, tag = 'internal scratch']
  %s0 = inlined_call_operand.hbm [shape: f32[8,32], index: 0, kind: input, shape index: {}]
  %s1 = inlined_call_operand.hbm [shape: f32[32,32], index: 1, kind: input, shape index: {}]
  %s2 = inlined_call_operand.hbm [shape: f32[8,32], index: 2, kind: output, shape index: {}]
  %s3 = sld [smem:[#allocation0]]
  $region26: #{tpu_custom_call.1} parent=0
    _
  %s5 = ssub.s32 1, %s3
  %s6 = scalar_select 0, %s5, %s3
  $region1: #{tpu_custom_call.1} parent=0
    #allocation2 [shape = 'u8[4096]{0}', space=vmem, size = 0x1000, scoped, tag = 'input window, operand 0, single buffered']
    #allocation3 [shape = 's32[1]{0}', space=sflag, size = 0x4, scoped, tag = 'scoped memory for tpu_custom_call.1']
    #allocation4 [shape = 's32[1]{0}', space=sflag, size = 0x4, scoped, tag = 'scoped memory for tpu_custom_call.1']
    #allocation5 [shape = 'u8[16384]{0}', space=vmem, size = 0x4000, scoped, tag = 'input window, operand 1, single buffered']
    #allocation6 [shape = 's32[1]{0}', space=sflag, size = 0x4, scoped, tag = 'scoped memory for tpu_custom_call.1']
    #allocation7 [shape = 'u8[4096]{0}', space=vmem, size = 0x1000, scoped, tag = 'output window, operand 0, single buffered']
    %7 = vsyncpa [#allocation3], 0
    %8 = vsyncpa [#allocation6], 0
    %9 = vsyncpa [#allocation4], 0
    // Predicated region
    $region2: #{tpu_custom_call.1} parent=1 // pred_check
      _
    $region3: #{tpu_custom_call.1} parent=1 // pred_check_branch
      %11 = sbr.rel (0) target = $region5
    $region4: #{tpu_custom_call.1} parent=1 // pred_region
      %13 = vsyncadd [#allocation3], 0
      %s15 = sshll.u32 %s0, 4
      %s16 = int_to_ptr.hbm [resolvable:$true] %s15
      %s17 = sshll.u32 [#allocation2], 4
      %s18 = int_to_ptr.vmem [resolvable:$true] %s17
      %20 = dma.hbm_to_vmem [thread:$0]  %s16, 128, %s18, [#allocation3]
    $region5: #{tpu_custom_call.1} parent=1 // pred_fallthru
      _
    // Predicated region
    $region6: #{tpu_custom_call.1} parent=1 // pred_check
      _
    $region7: #{tpu_custom_call.1} parent=1 // pred_check_branch
      %22 = sbr.rel (0) target = $region9
    $region8: #{tpu_custom_call.1} parent=1 // pred_region
      %24 = vsyncadd [#allocation6], 0
      %s25 = sshll.u32 %s1, 4
      %s26 = int_to_ptr.hbm [resolvable:$true] %s25
      %s27 = sshll.u32 [#allocation5], 4
      %s28 = int_to_ptr.vmem [resolvable:$true] %s27
      %33 = dma.hbm_to_vmem [thread:$0]  %s26, 512, %s28, [#allocation6], 128, 128, 8
    $region9: #{tpu_custom_call.1} parent=1 // pred_fallthru
      _
    // Predicated region
    $region10: #{tpu_custom_call.1} parent=1 // pred_check
      _
    $region11: #{tpu_custom_call.1} parent=1 // pred_check_branch
      %35 = sbr.rel (0) target = $region13
    $region12: #{tpu_custom_call.1} parent=1 // pred_region
      %37 = dma.done [#allocation3], 128
    $region13: #{tpu_custom_call.1} parent=1 // pred_fallthru
      _
    // Predicated region
    $region14: #{tpu_custom_call.1} parent=1 // pred_check
      _
    $region15: #{tpu_custom_call.1} parent=1 // pred_check_branch
      %39 = sbr.rel (0) target = $region17
    $region16: #{tpu_custom_call.1} parent=1 // pred_region
      %41 = dma.done [#allocation6], 512
    $region17: #{tpu_custom_call.1} parent=1 // pred_fallthru
      _
    %v42 = vld [vmem:[#allocation2] sm:$0xff]
    %v43 = vld [vmem:[#allocation5] sm:$0xff]
    %v44 = vld [vmem:[#allocation5 + $0x8] sm:$0xff]
    %v45 = vld [vmem:[#allocation5 + $0x10] sm:$0xff]
    %v46 = vld [vmem:[#allocation5 + $0x18] sm:$0xff]
    %vm47 = vcmask 261120
    %v49 = vsel %vm47, %v42, 0
    %51 = vmatpush.msra.mxu0 0.0
    %52 = vmatpush.msra.mxu0 0.0
    %53 = vmatpush.msra.mxu0 0.0
    %54 = vmatpush.msra.mxu0 0.0
    %55 = vmatpush.msra.mxu0 0.0
    %56 = vmatpush.msra.mxu0 0.0
    %57 = vmatpush.msra.mxu0 0.0
    %58 = vmatpush.msra.mxu0 0.0
    %59 = vmatpush.msra.mxu0 0.0
    %60 = vmatpush.msra.mxu0 0.0
    %61 = vmatpush.msra.mxu0 0.0
    %62 = vmatpush.msra.mxu0 0.0
    %63 = vmatpush.msra.mxu0 %v46
    %64 = vmatpush.msra.mxu0 %v45
    %65 = vmatpush.msra.mxu0 %v44
    %66 = vmatpush.msra.mxu0 %v43
    %67 = vmatmul.f32.gmra.mxu0 %v49
    %v68 = vpop.f32.mrf.mxu0
    %v69 = vadd.f32 %v42, %v68
    %70 = vdwg.mxu0
    %71 = vst.msk [vmem:[#allocation7] sm:$0xff] %vm47, %v69
    // Predicated region
    $region18: #{tpu_custom_call.1} parent=1 // pred_check
      _
    $region19: #{tpu_custom_call.1} parent=1 // pred_check_branch
      %73 = sbr.rel (0) target = $region21
    $region20: #{tpu_custom_call.1} parent=1 // pred_region
      %75 = vsyncadd [#allocation4], 0
      %s77 = sshll.u32 [#allocation7], 4
      %s78 = int_to_ptr.vmem [resolvable:$true] %s77
      %s79 = sshll.u32 %s2, 4
      %s80 = int_to_ptr.hbm [resolvable:$true] %s79
      %82 = dma.vmem_to_hbm [thread:$0]  %s78, 128, %s80, [#allocation4]
    $region21: #{tpu_custom_call.1} parent=1 // pred_fallthru
      _
    // Predicated region
    $region22: #{tpu_custom_call.1} parent=1 // pred_check
      _
    $region23: #{tpu_custom_call.1} parent=1 // pred_check_branch
      %84 = sbr.rel (0) target = $region25
    $region24: #{tpu_custom_call.1} parent=1 // pred_region
      %86 = dma.done [#allocation4], 128
    $region25: #{tpu_custom_call.1} parent=1 // pred_fallthru
      _
    %87 = vsyncpa [#allocation3], 1
    %88 = vsyncpa [#allocation6], 1
    %89 = vsyncpa [#allocation4], 1

</llo_original>
